<compile_context>
chip_gen: v7x
topology: tpu7x:2x2x1
jax: 0.10.0
libtpu: 0.0.40
codegen_flags: <defaults>
</compile_context>

<pallas_src>
import math

import jax
import jax.numpy as jnp
from jax.experimental import pallas as pl
from jax.experimental.pallas import tpu as pltpu

LANE = 128
_MASK_BIAS = -1e30        # finite "-inf": exp() underflows to exactly 0.0 in f32
_BN_EPS = 1e-5
_MAX_TILE_ROWS = 512      # upper bound for the batch tile (roofline-friendly)


# ----------------------------------------------------------------------------
# Fused EmoCLS kernel: fc1(+folded BN) -> ReLU -> fc2 -> log_softmax
# ----------------------------------------------------------------------------
def _emocls_kernel(x_ref, w1_ref, b1_ref, w2_ref, b2_ref, pred_ref, ebd_ref):
    # fc1: bf16 operands on the MXU, f32 accumulation.  The eval-mode BatchNorm
    # affine is already folded into w1/b1 host-side.  ReLU on the VPU (f32).
    h = jnp.dot(x_ref[...], w1_ref[...], preferred_element_type=jnp.float32)
    h = jnp.maximum(h + b1_ref[...], 0.0)
    # Dropout(p=0.3) is the identity in eval mode.
    ebd_ref[...] = h

    # Stage h through the (already allocated) VMEM output buffer so a large
    # (bm, n_hid) activation does not need to stay resident in vregs.
    h = ebd_ref[...]

    # fc2 on a lane-dense 128-wide padded class dim (padded cols: w=0, bias=-1e30,
    # so their exp() is exactly 0), then a numerically stable log_softmax.  Real
    # logits are O(10) >> -1e30, so the padding never influences the row max.
    logits = jnp.dot(h, w2_ref[...], preferred_element_type=jnp.float32) + b2_ref[...]
    z = logits - jnp.max(logits, axis=-1, keepdims=True)
    pred_ref[...] = z - jnp.log(jnp.sum(jnp.exp(z), axis=-1, keepdims=True))


# ----------------------------------------------------------------------------
# Host-side wrapper
# ----------------------------------------------------------------------------
def _vmem_capacity_bytes():
    # Per-generation physical VMEM (v5e/v6e: 128 MiB, v7x: 64 MiB/TC).
    try:
        return int(pltpu.get_tpu_info().vmem_capacity_bytes)
    except Exception:
        return 64 * 1024 * 1024   # conservative default (v7x)


def _choose_batch_tile(B, per_row_bytes, weight_bytes, vmem_cap):
    """Pick (bm, B_padded): largest useful 8-aligned tile that fits VMEM."""
    budget = max(1 << 20, int(0.45 * vmem_cap) - 2 * weight_bytes)
    fit_rows = max(8, budget // max(per_row_bytes, 1))
    cap = int(min(_MAX_TILE_ROWS, fit_rows))
    if B <= cap:
        # One grid step: block == full batch dim (legal even if B % 8 != 0).
        return B, B
    bm = (cap // 8) * 8
    b_pad = ((B + bm - 1) // bm) * bm
    return bm, b_pad


def emocls_forward(x, w_fc1, b_fc1, bn_scale, bn_bias, w_fc2, b_fc2):
    """EmoCLS forward (eval mode).

    x:        (B, h_dims)   f32
    w_fc1:    (h_dims, h_dims//2), b_fc1: (h_dims//2,)
    bn_scale: (h_dims//2,)  = gamma / sqrt(running_var + eps)
    bn_bias:  (h_dims//2,)  = beta - running_mean * bn_scale
    w_fc2:    (h_dims//2, n_cls),  b_fc2: (n_cls,)
    Returns (log_probs (B, n_cls), emo_ebd (B, h_dims//2)), both f32.
    """
    B, h_dims = x.shape
    n_hid = w_fc1.shape[1]
    n_cls = w_fc2.shape[1]

    # ---- fold eval-BatchNorm affine (and fc1 bias) into fc1, host side ------
    w1f = (w_fc1.astype(jnp.float32) * bn_scale.astype(jnp.float32)[None, :])
    b1f = (b_fc1.astype(jnp.float32) * bn_scale.astype(jnp.float32)
           + bn_bias.astype(jnp.float32)).reshape(1, n_hid)

    # bf16 MXU operands for fc1 (the dominant HBM read); accumulation stays f32.
    w1_bf = w1f.astype(jnp.bfloat16)
    x_bf = x.astype(jnp.bfloat16)

    # ---- lane-dense padding of the tiny class dimension ----------------------
    n_cls_p = max(LANE, ((n_cls + LANE - 1) // LANE) * LANE)
    w2p = jnp.zeros((n_hid, n_cls_p), jnp.float32).at[:, :n_cls].set(
        w_fc2.astype(jnp.float32))
    b2p = jnp.full((1, n_cls_p), _MASK_BIAS, jnp.float32).at[:, :n_cls].set(
        b_fc2.astype(jnp.float32).reshape(1, n_cls))

    # ---- batch tile + VMEM sizing (double-buffered tiles + resident weights) -
    per_row_bytes = 2 * (h_dims * 2 + n_hid * 4 + n_cls_p * 4)   # x(bf16)+ebd+pred, x2 buf
    weight_bytes = (h_dims * n_hid * 2 + n_hid * 4
                    + n_hid * n_cls_p * 4 + n_cls_p * 4)
    vmem_cap = _vmem_capacity_bytes()
    bm, b_pad = _choose_batch_tile(B, per_row_bytes, weight_bytes, vmem_cap)

    if b_pad != B:
        x_bf = jnp.pad(x_bf, ((0, b_pad - B), (0, 0)))

    grid = (b_pad // bm,)
    vmem_limit = int(min(int(0.75 * vmem_cap),
                         max(4 * 1024 * 1024,
                             2 * weight_bytes + bm * per_row_bytes + (2 << 20))))

    pred_p, ebd = pl.pallas_call(
        _emocls_kernel,
        out_shape=(jax.ShapeDtypeStruct((b_pad, n_cls_p), jnp.float32),
                   jax.ShapeDtypeStruct((b_pad, n_hid), jnp.float32)),
        grid=grid,
        in_specs=[
            pl.BlockSpec((bm, h_dims), lambda i: (i, 0)),       # x (batch-tiled, bf16)
            pl.BlockSpec((h_dims, n_hid), lambda i: (0, 0)),    # w1 (BN-folded, bf16)
            pl.BlockSpec((1, n_hid), lambda i: (0, 0)),         # b1 (BN-folded, f32)
            pl.BlockSpec((n_hid, n_cls_p), lambda i: (0, 0)),   # w_fc2 (lane-padded)
            pl.BlockSpec((1, n_cls_p), lambda i: (0, 0)),       # b_fc2 (lane-padded)
        ],
        out_specs=(
            pl.BlockSpec((bm, n_cls_p), lambda i: (i, 0)),      # log-probs (padded)
            pl.BlockSpec((bm, n_hid), lambda i: (i, 0)),        # emo embedding
        ),
        compiler_params=pltpu.CompilerParams(
            dimension_semantics=("parallel",),
            vmem_limit_bytes=vmem_limit,
        ),
    )(x_bf, w1_bf, b1f, w2p, b2p)

    # Drop class-dim padding and any batch padding outside the kernel.
    return pred_p[:B, :n_cls], ebd[:B]


# ----------------------------------------------------------------------------
# Helpers for the demo: deterministic init + pure-JAX reference
# ----------------------------------------------------------------------------
def _xavier_uniform(key, shape):
    fan_in, fan_out = shape
    bound = math.sqrt(6.0 / (fan_in + fan_out))
    return jax.random.uniform(key, shape, jnp.float32, -bound, bound)


def _reference(x, w_fc1, b_fc1, bn_scale, bn_bias, w_fc2, b_fc2):
    # Pure-JAX reference with the SAME bf16 operand quantization as the kernel
    # (bf16-rounded fc1 operands, f32 accumulation everywhere).
    hi = jax.lax.Precision.HIGHEST
    w1f = ((w_fc1 * bn_scale[None, :]).astype(jnp.bfloat16)).astype(jnp.float32)
    b1f = b_fc1 * bn_scale + bn_bias
    xb = x.astype(jnp.bfloat16).astype(jnp.float32)
    h = jnp.maximum(jnp.dot(xb, w1f, precision=hi) + b1f[None, :], 0.0)
    logits = jnp.dot(h, w_fc2, precision=hi) + b_fc2[None, :]
    return jax.nn.log_softmax(logits, axis=-1), h


if __name__ == "__main__":
    # EmoCLS defaults: h_dims=256, emotion_cls=4.  Small demo batch.
    B, h_dims, n_cls = 16, 256, 4
    n_hid = h_dims // 2

    key = jax.random.PRNGKey(0)
    kx, k1, kb1, k2, kb2 = jax.random.split(key, 5)

    x = jax.random.normal(kx, (B, h_dims), jnp.float32)

    w_fc1 = _xavier_uniform(k1, (h_dims, n_hid))
    b_fc1 = jax.random.uniform(kb1, (n_hid,), jnp.float32, -0.05, 0.05)
    w_fc2 = _xavier_uniform(k2, (n_hid, n_cls))
    b_fc2 = jax.random.uniform(kb2, (n_cls,), jnp.float32, -0.05, 0.05)

    # BatchNorm1d(n_hid) at default init, eval mode -> folded per-feature affine.
    gamma = jnp.ones((n_hid,), jnp.float32)
    beta = jnp.zeros((n_hid,), jnp.float32)
    run_mean = jnp.zeros((n_hid,), jnp.float32)
    run_var = jnp.ones((n_hid,), jnp.float32)
    bn_scale = gamma / jnp.sqrt(run_var + _BN_EPS)
    bn_bias = beta - run_mean * bn_scale

    fwd = jax.jit(emocls_forward)
    pred, emo_ebd = fwd(x, w_fc1, b_fc1, bn_scale, bn_bias, w_fc2, b_fc2)
    pred, emo_ebd = jax.block_until_ready((pred, emo_ebd))

    # Correctness checks.
    ref_pred, ref_ebd = _reference(x, w_fc1, b_fc1, bn_scale, bn_bias, w_fc2, b_fc2)

    assert pred.shape == (B, n_cls), pred.shape
    assert emo_ebd.shape == (B, n_hid), emo_ebd.shape
    # log-softmax rows exponentiate-and-sum to ~1
    assert bool(jnp.all(jnp.abs(jnp.sum(jnp.exp(pred), axis=-1) - 1.0) < 1e-3))
    # ReLU output is non-negative
    assert bool(jnp.all(emo_ebd >= 0.0))
    assert bool(jnp.allclose(pred, ref_pred, atol=1e-3, rtol=1e-3)), float(
        jnp.max(jnp.abs(pred - ref_pred)))
    assert bool(jnp.allclose(emo_ebd, ref_ebd, atol=1e-3, rtol=1e-3)), float(
        jnp.max(jnp.abs(emo_ebd - ref_ebd)))
    print("KERNEL_OK")
</pallas_src>

<mosaic_0001>
module attributes {stable_mosaic.version = 11 : i64} {
  func.func @_emocls_kernel(%arg0: i32, %arg1: memref<16x256xbf16, #tpu.memory_space<vmem>>, %arg2: memref<256x128xbf16, #tpu.memory_space<vmem>>, %arg3: memref<1x128xf32, #tpu.memory_space<vmem>>, %arg4: memref<128x128xf32, #tpu.memory_space<vmem>>, %arg5: memref<1x128xf32, #tpu.memory_space<vmem>>, %arg6: memref<16x128xf32, #tpu.memory_space<vmem>>, %arg7: memref<16x128xf32, #tpu.memory_space<vmem>>) attributes {dimension_semantics = [#tpu.dimension_semantics<parallel>], iteration_bounds = array<i64: 1>, scalar_prefetch = 0 : i64, scratch_operands = 0 : i64, tpu.core_type = #tpu.core_type<tc>, window_params = [{transform_indices = @transform_0, window_bounds = array<i64: 16, 256>}, {pipeline_mode = #tpu.pipeline_mode<synchronous>, transform_indices = @transform_1, window_bounds = array<i64: 256, 128>}, {pipeline_mode = #tpu.pipeline_mode<synchronous>, transform_indices = @transform_2, window_bounds = array<i64: 1, 128>}, {pipeline_mode = #tpu.pipeline_mode<synchronous>, transform_indices = @transform_3, window_bounds = array<i64: 128, 128>}, {pipeline_mode = #tpu.pipeline_mode<synchronous>, transform_indices = @transform_4, window_bounds = array<i64: 1, 128>}, {transform_indices = @transform_5, window_bounds = array<i64: 16, 128>}, {transform_indices = @transform_6, window_bounds = array<i64: 16, 128>}]} {
    %c0 = arith.constant 0 : index
    %c0_0 = arith.constant 0 : index
    %0 = vector.load %arg1[%c0, %c0_0] : memref<16x256xbf16, #tpu.memory_space<vmem>>, vector<16x256xbf16>
    %c0_1 = arith.constant 0 : index
    %c0_2 = arith.constant 0 : index
    %1 = vector.load %arg2[%c0_1, %c0_2] : memref<256x128xbf16, #tpu.memory_space<vmem>>, vector<256x128xbf16>
    %cst = arith.constant dense<0.000000e+00> : vector<16x128xf32>
    %2 = tpu.matmul %0, %1, %cst {dimension_numbers = #tpu.dot_dimension_numbers<[1], [0], [0], [1], [0, 0, 1, 1], [], []>} : vector<16x256xbf16>, vector<256x128xbf16>, vector<16x128xf32> -> vector<16x128xf32>
    %c0_3 = arith.constant 0 : index
    %c0_4 = arith.constant 0 : index
    %3 = vector.load %arg3[%c0_3, %c0_4] : memref<1x128xf32, #tpu.memory_space<vmem>>, vector<1x128xf32>
    %4 = vector.broadcast %3 : vector<1x128xf32> to vector<16x128xf32>
    %5 = arith.addf %2, %4 : vector<16x128xf32>
    %cst_5 = arith.constant 0.000000e+00 : f32
    %6 = vector.broadcast %cst_5 : f32 to vector<16x128xf32>
    %7 = arith.maximumf %5, %6 : vector<16x128xf32>
    %c0_6 = arith.constant 0 : index
    %c0_7 = arith.constant 0 : index
    %8 = vector.load %arg7[%c0_6, %c0_7] : memref<16x128xf32, #tpu.memory_space<vmem>>, vector<16x128xf32>
    tpu.vector_store %arg7[%c0_6, %c0_7], %7 {strides = array<i32>} : memref<16x128xf32, #tpu.memory_space<vmem>>, vector<16x128xf32>,
    %c0_8 = arith.constant 0 : index
    %c0_9 = arith.constant 0 : index
    %9 = vector.load %arg7[%c0_8, %c0_9] : memref<16x128xf32, #tpu.memory_space<vmem>>, vector<16x128xf32>
    %c0_10 = arith.constant 0 : index
    %c0_11 = arith.constant 0 : index
    %10 = vector.load %arg4[%c0_10, %c0_11] : memref<128x128xf32, #tpu.memory_space<vmem>>, vector<128x128xf32>
    %cst_12 = arith.constant dense<0.000000e+00> : vector<16x128xf32>
    %11 = tpu.matmul %9, %10, %cst_12 {dimension_numbers = #tpu.dot_dimension_numbers<[1], [0], [0], [1], [0, 0, 1, 1], [], []>} : vector<16x128xf32>, vector<128x128xf32>, vector<16x128xf32> -> vector<16x128xf32>
    %c0_13 = arith.constant 0 : index
    %c0_14 = arith.constant 0 : index
    %12 = vector.load %arg5[%c0_13, %c0_14] : memref<1x128xf32, #tpu.memory_space<vmem>>, vector<1x128xf32>
    %13 = vector.broadcast %12 : vector<1x128xf32> to vector<16x128xf32>
    %14 = arith.addf %11, %13 : vector<16x128xf32>
    %cst_15 = arith.constant dense<0xFF800000> : vector<16xf32>
    %15 = vector.multi_reduction <maximumf>, %14, %cst_15 [1] : vector<16x128xf32> to vector<16xf32>
    %16 = vector.shape_cast %15 : vector<16xf32> to vector<16x1xf32>
    %17 = vector.broadcast %16 : vector<16x1xf32> to vector<16x128xf32>
    %18 = arith.subf %14, %17 : vector<16x128xf32>
    %19 = math.exp %18 : vector<16x128xf32>
    %cst_16 = arith.constant dense<0.000000e+00> : vector<16xf32>
    %20 = vector.multi_reduction <add>, %19, %cst_16 [1] : vector<16x128xf32> to vector<16xf32>
    %21 = vector.shape_cast %20 : vector<16xf32> to vector<16x1xf32>
    %22 = math.log %21 : vector<16x1xf32>
    %23 = vector.broadcast %22 : vector<16x1xf32> to vector<16x128xf32>
    %24 = arith.subf %18, %23 : vector<16x128xf32>
    %c0_17 = arith.constant 0 : index
    %c0_18 = arith.constant 0 : index
    %25 = vector.load %arg6[%c0_17, %c0_18] : memref<16x128xf32, #tpu.memory_space<vmem>>, vector<16x128xf32>
    tpu.vector_store %arg6[%c0_17, %c0_18], %24 {strides = array<i32>} : memref<16x128xf32, #tpu.memory_space<vmem>>, vector<16x128xf32>,
    return
  }
  func.func @transform_0(%arg0: i32) -> (i32, i32) {
    %c0_i32 = arith.constant 0 : i32
    %c0_i32_0 = arith.constant 0 : i32
    return %arg0, %c0_i32 : i32, i32
  }
  func.func @transform_1(%arg0: i32) -> (i32, i32) {
    %c0_i32 = arith.constant 0 : i32
    %c0_i32_0 = arith.constant 0 : i32
    %c0_i32_1 = arith.constant 0 : i32
    return %c0_i32, %c0_i32_0 : i32, i32
  }
  func.func @transform_2(%arg0: i32) -> (i32, i32) {
    %c0_i32 = arith.constant 0 : i32
    %c0_i32_0 = arith.constant 0 : i32
    %c0_i32_1 = arith.constant 0 : i32
    return %c0_i32, %c0_i32_0 : i32, i32
  }
  func.func @transform_3(%arg0: i32) -> (i32, i32) {
    %c0_i32 = arith.constant 0 : i32
    %c0_i32_0 = arith.constant 0 : i32
    %c0_i32_1 = arith.constant 0 : i32
    return %c0_i32, %c0_i32_0 : i32, i32
  }
  func.func @transform_4(%arg0: i32) -> (i32, i32) {
    %c0_i32 = arith.constant 0 : i32
    %c0_i32_0 = arith.constant 0 : i32
    %c0_i32_1 = arith.constant 0 : i32
    return %c0_i32, %c0_i32_0 : i32, i32
  }
  func.func @transform_5(%arg0: i32) -> (i32, i32) {
    %c0_i32 = arith.constant 0 : i32
    %c0_i32_0 = arith.constant 0 : i32
    return %arg0, %c0_i32 : i32, i32
  }
  func.func @transform_6(%arg0: i32) -> (i32, i32) {
    %c0_i32 = arith.constant 0 : i32
    %c0_i32_0 = arith.constant 0 : i32
    return %arg0, %c0_i32 : i32, i32
  }
}

</mosaic_0001>

<llo_original>
// kernel: emocls_forward.1
$region0: #{emocls_forward.1}
  #allocation0 [shape = 'u32[]', space=smem, size = 0x4, offset = 0x4, fixed_abs, tag = 'smem constant byte address 0x4 - core index']
  #allocation1 [shape = 'u32[144,128]{1,0:T(1,128)}', space=vmem, size = 0x12000, scoped, tag = 'internal scratch']
  %s0 = inlined_call_operand.vmem [shape: bf16[16,256], index: 0, kind: input, shape index: {}]
  %s1 = inlined_call_operand.vmem [shape: bf16[256,128], index: 1, kind: input, shape index: {}]
  %s2 = inlined_call_operand.vmem [shape: f32[1,128], index: 2, kind: input, shape index: {}]
  %s3 = inlined_call_operand.vmem [shape: f32[128,128], index: 3, kind: input, shape index: {}]
  %s4 = inlined_call_operand.vmem [shape: f32[1,128], index: 4, kind: input, shape index: {}]
  %s5 = inlined_call_operand.vmem [shape: f32[16,128], index: 5, kind: output, shape index: {0}]
  %s6 = inlined_call_operand.hbm [shape: f32[16,128], index: 6, kind: output, shape index: {1}]
  %7 = xla_tuple %s5, %s6
  %s8 = sld [smem:[#allocation0]]
  $region38: #{emocls_forward.1} parent=0
    _
  %s10 = ssub.s32 1, %s8
  %s11 = scalar_select 0, %s10, %s8
  $region1: #{emocls_forward.1} parent=0
    #allocation2 [shape = 'u8[8192]{0}', space=vmem, size = 0x2000, scoped, tag = 'output window, operand 1, single buffered']
    #allocation3 [shape = 's32[1]{0}', space=sflag, size = 0x4, scoped, tag = 'scoped memory for emocls_forward.1']
    %12 = vsyncpa [#allocation3], 0
    // Predicated region
    $region2: #{emocls_forward.1} parent=1 // pred_check
      _
    $region3: #{emocls_forward.1} parent=1 // pred_check_branch
      %14 = sbr.rel (0) target = $region5
    $region4: #{emocls_forward.1} parent=1 // pred_region
      _
    $region5: #{emocls_forward.1} parent=1 // pred_fallthru
      _
    // Predicated region
    $region6: #{emocls_forward.1} parent=1 // pred_check
      _
    $region7: #{emocls_forward.1} parent=1 // pred_check_branch
      %16 = sbr.rel (0) target = $region9
    $region8: #{emocls_forward.1} parent=1 // pred_region
      _
    $region9: #{emocls_forward.1} parent=1 // pred_fallthru
      _
    // Predicated region
    $region10: #{emocls_forward.1} parent=1 // pred_check
      _
    $region11: #{emocls_forward.1} parent=1 // pred_check_branch
      %18 = sbr.rel (0) target = $region13
    $region12: #{emocls_forward.1} parent=1 // pred_region
      _
    $region13: #{emocls_forward.1} parent=1 // pred_fallthru
      _
    // Predicated region
    $region14: #{emocls_forward.1} parent=1 // pred_check
      _
    $region15: #{emocls_forward.1} parent=1 // pred_check_branch
      %20 = sbr.rel (0) target = $region17
    $region16: #{emocls_forward.1} parent=1 // pred_region
      _
    $region17: #{emocls_forward.1} parent=1 // pred_fallthru
      _
    // Predicated region
    $region18: #{emocls_forward.1} parent=1 // pred_check
      _
    $region19: #{emocls_forward.1} parent=1 // pred_check_branch
      %22 = sbr.rel (0) target = $region21
    $region20: #{emocls_forward.1} parent=1 // pred_region
      _
    $region21: #{emocls_forward.1} parent=1 // pred_fallthru
      _
    %v24 = vld [vmem:[%s0] sm:$0xff]
    %v25 = vld [vmem:[%s0 + $0x8] sm:$0xff]
    %v26 = vld [vmem:[%s1] sm:$0xf]
    %v27 = vld [vmem:[%s1 + $0x4] sm:$0xf]
    %v28 = vld [vmem:[%s1 + $0x8] sm:$0xf]
    %v29 = vld [vmem:[%s1 + $0xc] sm:$0xf]
    %v30 = vld [vmem:[%s1 + $0x10] sm:$0xf]
    %v31 = vld [vmem:[%s1 + $0x14] sm:$0xf]
    %v32 = vld [vmem:[%s1 + $0x18] sm:$0xf]
    %v33 = vld [vmem:[%s1 + $0x1c] sm:$0xf]
    %v34 = vld [vmem:[%s1 + $0x20] sm:$0xf]
    %v35 = vld [vmem:[%s1 + $0x24] sm:$0xf]
    %v36 = vld [vmem:[%s1 + $0x28] sm:$0xf]
    %v37 = vld [vmem:[%s1 + $0x2c] sm:$0xf]
    %v38 = vld [vmem:[%s1 + $0x30] sm:$0xf]
    %v39 = vld [vmem:[%s1 + $0x34] sm:$0xf]
    %v40 = vld [vmem:[%s1 + $0x38] sm:$0xf]
    %v41 = vld [vmem:[%s1 + $0x3c] sm:$0xf]
    %v42 = vld [vmem:[%s1 + $0x40] sm:$0xf]
    %v43 = vld [vmem:[%s1 + $0x44] sm:$0xf]
    %v44 = vld [vmem:[%s1 + $0x48] sm:$0xf]
    %v45 = vld [vmem:[%s1 + $0x4c] sm:$0xf]
    %v46 = vld [vmem:[%s1 + $0x50] sm:$0xf]
    %v47 = vld [vmem:[%s1 + $0x54] sm:$0xf]
    %v48 = vld [vmem:[%s1 + $0x58] sm:$0xf]
    %v49 = vld [vmem:[%s1 + $0x5c] sm:$0xf]
    %v50 = vld [vmem:[%s1 + $0x60] sm:$0xf]
    %v51 = vld [vmem:[%s1 + $0x64] sm:$0xf]
    %v52 = vld [vmem:[%s1 + $0x68] sm:$0xf]
    %v53 = vld [vmem:[%s1 + $0x6c] sm:$0xf]
    %v54 = vld [vmem:[%s1 + $0x70] sm:$0xf]
    %v55 = vld [vmem:[%s1 + $0x74] sm:$0xf]
    %v56 = vld [vmem:[%s1 + $0x78] sm:$0xf]
    %v57 = vld [vmem:[%s1 + $0x7c] sm:$0xf]
    %v58 = vld [vmem:[%s2] sm:$0x1]
    %v60 = vlaneseq
    %v61 = vshrl.u32 %v60, 7
    %v62 = vsub.s32 0, %v61
    %v63 = vrot.slane %v58, %v62
    %v67 = vunpack.c.l.b16 %v24
    %v68 = vunpack.c.h.b16 %v24
    %v69 = vunpack.c.l.b16 %v25
    %v70 = vunpack.c.h.b16 %v25
    %v71 = vpack.c.b16 %v69, %v67
    %v72 = vpack.c.b16 %v70, %v68
    %v107 = vunpack.c.l.b16 %v26
    %v108 = vunpack.c.l.b16 %v27
    %v109 = vunpack.c.l.b16 %v28
    %v110 = vunpack.c.l.b16 %v29
    %v111 = vunpack.c.l.b16 %v30
    %v112 = vunpack.c.l.b16 %v31
    %v113 = vunpack.c.l.b16 %v32
    %v114 = vunpack.c.l.b16 %v33
    %v115 = vunpack.c.l.b16 %v34
    %v116 = vunpack.c.l.b16 %v35
    %v117 = vunpack.c.l.b16 %v36
    %v118 = vunpack.c.l.b16 %v37
    %v119 = vunpack.c.l.b16 %v38
    %v120 = vunpack.c.l.b16 %v39
    %v121 = vunpack.c.l.b16 %v40
    %v122 = vunpack.c.l.b16 %v41
    %v123 = vunpack.c.l.b16 %v42
    %v124 = vunpack.c.l.b16 %v43
    %v125 = vunpack.c.l.b16 %v44
    %v126 = vunpack.c.l.b16 %v45
    %v127 = vunpack.c.l.b16 %v46
    %v128 = vunpack.c.l.b16 %v47
    %v129 = vunpack.c.l.b16 %v48
    %v130 = vunpack.c.l.b16 %v49
    %v131 = vunpack.c.l.b16 %v50
    %v132 = vunpack.c.l.b16 %v51
    %v133 = vunpack.c.l.b16 %v52
    %v134 = vunpack.c.l.b16 %v53
    %v135 = vunpack.c.l.b16 %v54
    %v136 = vunpack.c.l.b16 %v55
    %v137 = vunpack.c.l.b16 %v56
    %v138 = vunpack.c.l.b16 %v57
    %v139 = vpack.c.b16 %v108, %v107
    %v140 = vpack.c.b16 %v110, %v109
    %v141 = vpack.c.b16 %v112, %v111
    %v142 = vpack.c.b16 %v114, %v113
    %v143 = vpack.c.b16 %v116, %v115
    %v144 = vpack.c.b16 %v118, %v117
    %v145 = vpack.c.b16 %v120, %v119
    %v146 = vpack.c.b16 %v122, %v121
    %v147 = vpack.c.b16 %v124, %v123
    %v148 = vpack.c.b16 %v126, %v125
    %v149 = vpack.c.b16 %v128, %v127
    %v150 = vpack.c.b16 %v130, %v129
    %v151 = vpack.c.b16 %v132, %v131
    %v152 = vpack.c.b16 %v134, %v133
    %v153 = vpack.c.b16 %v136, %v135
    %v154 = vpack.c.b16 %v138, %v137
    %171 = vmatprep.subr.bf16.mxu0 0
    %172 = vmatpush1.bf16.msra.mxu0 %v139
    %173 = vmatprep.subr.bf16.mxu0 0
    %174 = vmatpush1.bf16.msra.mxu0 %v140
    %175 = vmatprep.subr.bf16.mxu0 0
    %176 = vmatpush1.bf16.msra.mxu0 %v141
    %177 = vmatprep.subr.bf16.mxu0 0
    %178 = vmatpush1.bf16.msra.mxu0 %v142
    %179 = vmatprep.subr.bf16.mxu0 0
    %180 = vmatpush1.bf16.msra.mxu0 %v143
    %181 = vmatprep.subr.bf16.mxu0 0
    %182 = vmatpush1.bf16.msra.mxu0 %v144
    %183 = vmatprep.subr.bf16.mxu0 0
    %184 = vmatpush1.bf16.msra.mxu0 %v145
    %185 = vmatprep.subr.bf16.mxu0 0
    %186 = vmatpush1.bf16.msra.mxu0 %v146
    %187 = vmatprep.subr.bf16.mxu0 0
    %188 = vmatpush1.bf16.msra.mxu0 %v147
    %189 = vmatprep.subr.bf16.mxu0 0
    %190 = vmatpush1.bf16.msra.mxu0 %v148
    %191 = vmatprep.subr.bf16.mxu0 0
    %192 = vmatpush1.bf16.msra.mxu0 %v149
    %193 = vmatprep.subr.bf16.mxu0 0
    %194 = vmatpush1.bf16.msra.mxu0 %v150
    %195 = vmatprep.subr.bf16.mxu0 0
    %196 = vmatpush1.bf16.msra.mxu0 %v151
    %197 = vmatprep.subr.bf16.mxu0 0
    %198 = vmatpush1.bf16.msra.mxu0 %v152
    %199 = vmatprep.subr.bf16.mxu0 0
    %200 = vmatpush1.bf16.msra.mxu0 %v153
    %201 = vmatprep.subr.bf16.mxu0 0
    %202 = vmatpush1.bf16.msra.mxu0 %v154
    %203 = vmatprep.mubr.bf16.mxu0 %v72
    %204 = vmatmul.mubr.bf16.gmra.mrb[0].mxu0 %v71
    %v205 = vpop.f32.mrb[0].mxu0
    %v206 = vadd.f32 %v63, %v205
    %v207 = vpop.f32.mrb[0].mxu0
    %v208 = vpop.f32.mrb[0].mxu0
    %v209 = vadd.f32 %v63, %v208
    %v210 = vpop.f32.mrb[0].mxu0
    %211 = vdwg.mxu0
    %v212 = vmax.f32 %v206, 0.0
    %v213 = vmax.f32 %v209, 0.0
    %214 = vst [vmem:[#allocation2] sm:$0xff] %v212
    %215 = vst [vmem:[#allocation2 + $0x8] sm:$0xff] %v213
    %v216 = vld [vmem:[#allocation2] sm:$0xff]
    %v217 = vld [vmem:[#allocation2 + $0x8] sm:$0xff]
    %v218 = vld [vmem:[%s3] sm:$0xff]
    %v219 = vld [vmem:[%s3 + $0x8] sm:$0xff]
    %v220 = vld [vmem:[%s3 + $0x10] sm:$0xff]
    %v221 = vld [vmem:[%s3 + $0x18] sm:$0xff]
    %v222 = vld [vmem:[%s3 + $0x20] sm:$0xff]
    %v223 = vld [vmem:[%s3 + $0x28] sm:$0xff]
    %v224 = vld [vmem:[%s3 + $0x30] sm:$0xff]
    %v225 = vld [vmem:[%s3 + $0x38] sm:$0xff]
    %v226 = vld [vmem:[%s3 + $0x40] sm:$0xff]
    %v227 = vld [vmem:[%s3 + $0x48] sm:$0xff]
    %v228 = vld [vmem:[%s3 + $0x50] sm:$0xff]
    %v229 = vld [vmem:[%s3 + $0x58] sm:$0xff]
    %v230 = vld [vmem:[%s3 + $0x60] sm:$0xff]
    %v231 = vld [vmem:[%s3 + $0x68] sm:$0xff]
    %v232 = vld [vmem:[%s3 + $0x70] sm:$0xff]
    %v233 = vld [vmem:[%s3 + $0x78] sm:$0xff]
    %v234 = vld [vmem:[%s4] sm:$0x1]
    %v236 = vlaneseq
    %v237 = vshrl.u32 %v236, 7
    %v238 = vsub.s32 0, %v237
    %v239 = vrot.slane %v234, %v238
    %241 = vmatprep.subr.mxu0 0.0
    %242 = vmatpush1.msra.mxu0 %v218
    %243 = vmatprep.subr.mxu0 0.0
    %244 = vmatpush1.msra.mxu0 %v219
    %245 = vmatprep.subr.mxu0 0.0
    %246 = vmatpush1.msra.mxu0 %v220
    %247 = vmatprep.subr.mxu0 0.0
    %248 = vmatpush1.msra.mxu0 %v221
    %249 = vmatprep.subr.mxu0 0.0
    %250 = vmatpush1.msra.mxu0 %v222
    %251 = vmatprep.subr.mxu0 0.0
    %252 = vmatpush1.msra.mxu0 %v223
    %253 = vmatprep.subr.mxu0 0.0
    %254 = vmatpush1.msra.mxu0 %v224
    %255 = vmatprep.subr.mxu0 0.0
    %256 = vmatpush1.msra.mxu0 %v225
    %257 = vmatprep.subr.mxu0 0.0
    %258 = vmatpush1.msra.mxu0 %v226
    %259 = vmatprep.subr.mxu0 0.0
    %260 = vmatpush1.msra.mxu0 %v227
    %261 = vmatprep.subr.mxu0 0.0
    %262 = vmatpush1.msra.mxu0 %v228
    %263 = vmatprep.subr.mxu0 0.0
    %264 = vmatpush1.msra.mxu0 %v229
    %265 = vmatprep.subr.mxu0 0.0
    %266 = vmatpush1.msra.mxu0 %v230
    %267 = vmatprep.subr.mxu0 0.0
    %268 = vmatpush1.msra.mxu0 %v231
    %269 = vmatprep.subr.mxu0 0.0
    %270 = vmatpush1.msra.mxu0 %v232
    %271 = vmatprep.subr.mxu0 0.0
    %272 = vmatpush1.msra.mxu0 %v233
    %273 = vmatprep.subr.mxu0 0.0
    %274 = vmatpush1.msra.mxu0 0.0
    %275 = vmatprep.subr.mxu0 0.0
    %276 = vmatpush1.msra.mxu0 0.0
    %277 = vmatprep.subr.mxu0 0.0
    %278 = vmatpush1.msra.mxu0 0.0
    %279 = vmatprep.subr.mxu0 0.0
    %280 = vmatpush1.msra.mxu0 0.0
    %281 = vmatprep.subr.mxu0 0.0
    %282 = vmatpush1.msra.mxu0 0.0
    %283 = vmatprep.subr.mxu0 0.0
    %284 = vmatpush1.msra.mxu0 0.0
    %285 = vmatprep.subr.mxu0 0.0
    %286 = vmatpush1.msra.mxu0 0.0
    %287 = vmatprep.subr.mxu0 0.0
    %288 = vmatpush1.msra.mxu0 0.0
    %289 = vmatprep.subr.mxu0 0.0
    %290 = vmatpush1.msra.mxu0 0.0
    %291 = vmatprep.subr.mxu0 0.0
    %292 = vmatpush1.msra.mxu0 0.0
    %293 = vmatprep.subr.mxu0 0.0
    %294 = vmatpush1.msra.mxu0 0.0
    %295 = vmatprep.subr.mxu0 0.0
    %296 = vmatpush1.msra.mxu0 0.0
    %297 = vmatprep.subr.mxu0 0.0
    %298 = vmatpush1.msra.mxu0 0.0
    %299 = vmatprep.subr.mxu0 0.0
    %300 = vmatpush1.msra.mxu0 0.0
    %301 = vmatprep.subr.mxu0 0.0
    %302 = vmatpush1.msra.mxu0 0.0
    %303 = vmatprep.subr.mxu0 0.0
    %304 = vmatpush1.msra.mxu0 0.0
    %305 = vmatprep.mubr.f32.mxu0 0.0
    %306 = vmatmul.mubr.f32.gmra.mrb[0].mxu0 %v216
    %v307 = vpop.f32.mrb[0].mxu0
    %v308 = vadd.f32 %v239, %v307
    %v309 = vpop.f32.mrb[0].mxu0
    %310 = vmatprep.mubr.f32.mxu0 0.0
    %311 = vmatmul.mubr.f32.gmra.mrb[0].mxu0 %v217
    %v312 = vpop.f32.mrb[0].mxu0
    %v313 = vadd.f32 %v239, %v312
    %v314 = vpop.f32.mrb[0].mxu0
    %315 = vdwg.mxu0
    %316 = vmax.xlane.f32.xlu0 %v308
    %v317 = vpop.xlane.xlu0 %316
    %318 = vmax.xlane.f32.xlu0 %v313
    %v319 = vpop.xlane.xlu0 %318
    %v320 = vsub.f32 %v308, %v317
    %v321 = vsub.f32 %v313, %v319
    %v322 = vmul.f32 %v320, 1.442695
    %v323 = vpow.pop %v322
    %v324 = vmul.f32 %v321, 1.442695
    %v325 = vpow.pop %v324
    %326 = vadd.xlane.f32.xlu0 %v323
    %v327 = vpop.xlane.xlu0 %326
    %328 = vadd.xlane.f32.xlu0 %v325
    %v329 = vpop.xlane.xlu0 %328
    %v330 = vlog2.pop %v327
    %v331 = vmul.f32 %v330, 0.6931472
    %v332 = vlog2.pop %v329
    %v333 = vmul.f32 %v332, 0.6931472
    %v334 = vsub.f32 %v320, %v331
    %v335 = vsub.f32 %v321, %v333
    %336 = vst [vmem:[%s5] sm:$0xff] %v334
    %337 = vst [vmem:[%s5 + $0x8] sm:$0xff] %v335
    // Predicated region
    $region22: #{emocls_forward.1} parent=1 // pred_check
      _
    $region23: #{emocls_forward.1} parent=1 // pred_check_branch
      %339 = sbr.rel (0) target = $region25
    $region24: #{emocls_forward.1} parent=1 // pred_region
      _
    $region25: #{emocls_forward.1} parent=1 // pred_fallthru
      _
    // Predicated region
    $region26: #{emocls_forward.1} parent=1 // pred_check
      _
    $region27: #{emocls_forward.1} parent=1 // pred_check_branch
      %341 = sbr.rel (0) target = $region29
    $region28: #{emocls_forward.1} parent=1 // pred_region
      %s343 = ssub.s32 256, 256
      %344 = vsyncadd [#allocation3], %s343
      %s345 = sshll.u32 [#allocation2], 4
      %s346 = int_to_ptr.vmem [resolvable:$true] %s345
      %351 = dma.vmem_to_hbm [thread:$0]  %s346, 256, %s6, [#allocation3], 128, 128, 8
    $region29: #{emocls_forward.1} parent=1 // pred_fallthru
      _
    // Predicated region
    $region30: #{emocls_forward.1} parent=1 // pred_check
      _
    $region31: #{emocls_forward.1} parent=1 // pred_check_branch
      %353 = sbr.rel (0) target = $region33
    $region32: #{emocls_forward.1} parent=1 // pred_region
      _
    $region33: #{emocls_forward.1} parent=1 // pred_fallthru
      _
    // Predicated region
    $region34: #{emocls_forward.1} parent=1 // pred_check
      _
    $region35: #{emocls_forward.1} parent=1 // pred_check_branch
      %355 = sbr.rel (0) target = $region37
    $region36: #{emocls_forward.1} parent=1 // pred_region
      %356 = dma.done [#allocation3], 256
    $region37: #{emocls_forward.1} parent=1 // pred_fallthru
      _
    %357 = vsyncpa [#allocation3], 1

</llo_original>
